<compile_context>
chip_gen: v5e
topology: v5e:2x2
jax: 0.10.0
libtpu: 0.0.40
codegen_flags: <defaults>
</compile_context>

<pallas_src>
import jax
import jax.numpy as jnp
from jax.experimental import pallas as pl
from jax.experimental.pallas import tpu as pltpu

_LANES = 1024                        # lane-dense slab width (multiple of 128)
_SUBLANES = 8                        # sublane alignment for row blocks
_TARGET_BLOCK_BYTES = 2 * 1024 * 1024  # ~2 MiB per block


def _identity_kernel(x_ref, o_ref):
    # The entire "compute" of IdentityModule: pass the tile through unchanged.
    o_ref[...] = x_ref[...]


def identity_pallas(x: jax.Array) -> jax.Array:
    """Pallas implementation of IdentityModule.forward: returns x unchanged."""
    orig_shape = x.shape
    orig_dtype = x.dtype
    n = x.size
    if n == 0:
        return x

    itemsize = jnp.dtype(orig_dtype).itemsize

    # Flatten and pad up to a (rows, _LANES) slab with rows a multiple of 8 so
    # every block is fully (8, 128)-aligned and stores are unmasked & lane-dense.
    flat = x.reshape(-1)
    chunk = _LANES * _SUBLANES
    padded_n = pl.cdiv(n, chunk) * chunk
    if padded_n != n:
        flat = jnp.pad(flat, (0, padded_n - n))
    rows = padded_n // _LANES
    slab = flat.reshape(rows, _LANES)

    # Byte-budget-driven row block (multiple of 8, capped at the full extent).
    block_rows = (_TARGET_BLOCK_BYTES // (_LANES * itemsize)) // _SUBLANES * _SUBLANES
    block_rows = max(_SUBLANES, block_rows)
    block_rows = min(block_rows, rows)
    grid = (pl.cdiv(rows, block_rows),)

    out_slab = pl.pallas_call(
        _identity_kernel,
        out_shape=jax.ShapeDtypeStruct((rows, _LANES), orig_dtype),
        grid_spec=pltpu.PrefetchScalarGridSpec(
            num_scalar_prefetch=0,
            grid=grid,
            in_specs=[pl.BlockSpec((block_rows, _LANES), lambda i: (i, 0))],
            out_specs=pl.BlockSpec((block_rows, _LANES), lambda i: (i, 0)),
        ),
        compiler_params=pltpu.CompilerParams(
            dimension_semantics=("parallel",),
        ),
        cost_estimate=pl.CostEstimate(
            flops=0,
            transcendentals=0,
            bytes_accessed=2 * n * itemsize,
        ),
    )(slab)

    out_flat = out_slab.reshape(-1)
    if padded_n != n:
        out_flat = out_flat[:n]
    return out_flat.reshape(orig_shape)


if __name__ == "__main__":
    key = jax.random.PRNGKey(0)
    # Small NCHW input consistent with a conv-style module: batch=2, channels=4, spatial=16x16.
    x = jax.random.normal(key, (2, 4, 16, 16), dtype=jnp.float32)

    y = identity_pallas(x)
    jax.block_until_ready(y)

    assert y.shape == x.shape, (y.shape, x.shape)
    assert y.dtype == x.dtype, (y.dtype, x.dtype)
    assert bool(jnp.all(y == x)), "identity output mismatch"

    print("KERNEL_OK")
</pallas_src>

<mosaic_0001>
module attributes {stable_mosaic.version = 11 : i64} {
  func.func @_identity_kernel(%arg0: i32, %arg1: memref<8x1024xf32, #tpu.memory_space<vmem>>, %arg2: memref<8x1024xf32, #tpu.memory_space<vmem>>) attributes {dimension_semantics = [#tpu.dimension_semantics<parallel>], iteration_bounds = array<i64: 1>, scalar_prefetch = 0 : i64, scratch_operands = 0 : i64, tpu.core_type = #tpu.core_type<tc>, window_params = [{transform_indices = @transform_0, window_bounds = array<i64: 8, 1024>}, {transform_indices = @transform_1, window_bounds = array<i64: 8, 1024>}]} {
    %c0 = arith.constant 0 : index
    %c0_0 = arith.constant 0 : index
    %0 = vector.load %arg1[%c0, %c0_0] : memref<8x1024xf32, #tpu.memory_space<vmem>>, vector<8x1024xf32>
    %c0_1 = arith.constant 0 : index
    %c0_2 = arith.constant 0 : index
    %1 = vector.load %arg2[%c0_1, %c0_2] : memref<8x1024xf32, #tpu.memory_space<vmem>>, vector<8x1024xf32>
    tpu.vector_store %arg2[%c0_1, %c0_2], %0 {strides = array<i32>} : memref<8x1024xf32, #tpu.memory_space<vmem>>, vector<8x1024xf32>,
    return
  }
  func.func @transform_0(%arg0: i32) -> (i32, i32) {
    %c0_i32 = arith.constant 0 : i32
    %c0_i32_0 = arith.constant 0 : i32
    return %arg0, %c0_i32 : i32, i32
  }
  func.func @transform_1(%arg0: i32) -> (i32, i32) {
    %c0_i32 = arith.constant 0 : i32
    %c0_i32_0 = arith.constant 0 : i32
    return %arg0, %c0_i32 : i32, i32
  }
}

</mosaic_0001>

<llo_original>
// kernel: tpu_custom_call.1
$region0: #{tpu_custom_call.1}
  #allocation0 [shape = 'u32[]', space=smem, size = 0x4, offset = 0x4, fixed_abs, tag = 'smem constant byte address 0x4 - core index']
  #allocation1 [shape = 'u32[72,128]{1,0:T(1,128)}', space=vmem, size = 0x9000, scoped, tag = 'internal scratch']
  %s0 = inlined_call_operand.hbm [shape: f32[8,1024], index: 0, kind: input, shape index: {}]
  %s1 = inlined_call_operand.hbm [shape: f32[8,1024], index: 1, kind: output, shape index: {}]
  %s2 = sld [smem:[#allocation0]]
  $region18: #{tpu_custom_call.1} parent=0
    _
  %s4 = ssub.s32 1, %s2
  %s5 = scalar_select 0, %s4, %s2
  $region1: #{tpu_custom_call.1} parent=0
    #allocation2 [shape = 'u8[32768]{0}', space=vmem, size = 0x8000, scoped, tag = 'input window, operand 0, single buffered']
    #allocation3 [shape = 's32[1]{0}', space=sflag, size = 0x4, scoped, tag = 'scoped memory for tpu_custom_call.1']
    #allocation4 [shape = 's32[1]{0}', space=sflag, size = 0x4, scoped, tag = 'scoped memory for tpu_custom_call.1']
    #allocation5 [shape = 'u8[32768]{0}', space=vmem, size = 0x8000, scoped, tag = 'output window, operand 0, single buffered']
    %6 = vsyncpa [#allocation3], 0
    %7 = vsyncpa [#allocation4], 0
    // Predicated region
    $region2: #{tpu_custom_call.1} parent=1 // pred_check
      _
    $region3: #{tpu_custom_call.1} parent=1 // pred_check_branch
      %9 = sbr.rel (0) target = $region5
    $region4: #{tpu_custom_call.1} parent=1 // pred_region
      %11 = vsyncadd [#allocation3], 0
      %s13 = sshll.u32 %s0, 4
      %s14 = int_to_ptr.hbm [resolvable:$true] %s13
      %s15 = sshll.u32 [#allocation2], 4
      %s16 = int_to_ptr.vmem [resolvable:$true] %s15
      %18 = dma.hbm_to_vmem [thread:$0]  %s14, 1024, %s16, [#allocation3]
    $region5: #{tpu_custom_call.1} parent=1 // pred_fallthru
      _
    // Predicated region
    $region6: #{tpu_custom_call.1} parent=1 // pred_check
      _
    $region7: #{tpu_custom_call.1} parent=1 // pred_check_branch
      %20 = sbr.rel (0) target = $region9
    $region8: #{tpu_custom_call.1} parent=1 // pred_region
      %22 = dma.done [#allocation3], 1024
    $region9: #{tpu_custom_call.1} parent=1 // pred_fallthru
      _
    %v23 = vld [vmem:[#allocation2] sm:$0xff]
    %v24 = vld [vmem:[#allocation2 + $0x8] sm:$0xff]
    %v25 = vld [vmem:[#allocation2 + $0x10] sm:$0xff]
    %v26 = vld [vmem:[#allocation2 + $0x18] sm:$0xff]
    %v27 = vld [vmem:[#allocation2 + $0x20] sm:$0xff]
    %v28 = vld [vmem:[#allocation2 + $0x28] sm:$0xff]
    %v29 = vld [vmem:[#allocation2 + $0x30] sm:$0xff]
    %v30 = vld [vmem:[#allocation2 + $0x38] sm:$0xff]
    %31 = vst [vmem:[#allocation5] sm:$0xff] %v23
    %32 = vst [vmem:[#allocation5 + $0x8] sm:$0xff] %v24
    %33 = vst [vmem:[#allocation5 + $0x10] sm:$0xff] %v25
    %34 = vst [vmem:[#allocation5 + $0x18] sm:$0xff] %v26
    %35 = vst [vmem:[#allocation5 + $0x20] sm:$0xff] %v27
    %36 = vst [vmem:[#allocation5 + $0x28] sm:$0xff] %v28
    %37 = vst [vmem:[#allocation5 + $0x30] sm:$0xff] %v29
    %38 = vst [vmem:[#allocation5 + $0x38] sm:$0xff] %v30
    // Predicated region
    $region10: #{tpu_custom_call.1} parent=1 // pred_check
      _
    $region11: #{tpu_custom_call.1} parent=1 // pred_check_branch
      %40 = sbr.rel (0) target = $region13
    $region12: #{tpu_custom_call.1} parent=1 // pred_region
      %42 = vsyncadd [#allocation4], 0
      %s44 = sshll.u32 [#allocation5], 4
      %s45 = int_to_ptr.vmem [resolvable:$true] %s44
      %s46 = sshll.u32 %s1, 4
      %s47 = int_to_ptr.hbm [resolvable:$true] %s46
      %49 = dma.vmem_to_hbm [thread:$0]  %s45, 1024, %s47, [#allocation4]
    $region13: #{tpu_custom_call.1} parent=1 // pred_fallthru
      _
    // Predicated region
    $region14: #{tpu_custom_call.1} parent=1 // pred_check
      _
    $region15: #{tpu_custom_call.1} parent=1 // pred_check_branch
      %51 = sbr.rel (0) target = $region17
    $region16: #{tpu_custom_call.1} parent=1 // pred_region
      %53 = dma.done [#allocation4], 1024
    $region17: #{tpu_custom_call.1} parent=1 // pred_fallthru
      _
    %54 = vsyncpa [#allocation3], 1
    %55 = vsyncpa [#allocation4], 1

</llo_original>
